<compile_context>
chip_gen: v7x
topology: tpu7x:2x2x1
jax: 0.10.0
libtpu: 0.0.40
codegen_flags: <defaults>
</compile_context>

<pallas_src>
import functools

import jax
import jax.numpy as jnp
from jax.experimental import pallas as pl
from jax.experimental.pallas import tpu as pltpu


# ---------------------------------------------------------------------------
# Kernel: one fused matmul + bias add per batch tile.
# ---------------------------------------------------------------------------
def _fused_linear_kernel(x_ref, w_ref, b_ref, o_ref):
    # x_ref : [TB, IN]      (VMEM)  input batch tile (any float dtype)
    # w_ref : [IN, OUT]     (VMEM)  fused (w1.T @ w2.T), f32 or bf16
    # b_ref : [1, OUT]      (VMEM)  fused bias, f32
    # o_ref : [TB, OUT]     (VMEM)  compact output tile, f32
    x = x_ref[...].astype(w_ref.dtype)      # in-kernel cast: free (VPU slack)
    acc = jnp.dot(x, w_ref[...], preferred_element_type=jnp.float32)
    o_ref[...] = (acc + b_ref[...]).astype(o_ref.dtype)


# ---------------------------------------------------------------------------
# One-time parameter preparation (algebraic fusion + optional bf16 cast).
# ---------------------------------------------------------------------------
def prepare_params(w1, b1, w2, b2, *, use_bf16=False):
    """Fuse the two Linear layers into a single (weight, bias) pair.

    w1: [10, in_ch]   (torch nn.Linear weight layout)
    b1: [10]
    w2: [out_ch, 10]
    b2: [out_ch]

    Returns (w_fused [in_ch, out_ch], b_fused [1, out_ch] f32).
    Note: quantizing the *fused* weight to bf16 differs slightly from running
    two bf16 layers; acceptable for this memory-bound model (tested below).
    """
    # y = (x @ w1.T + b1) @ w2.T + b2 = x @ (w1.T @ w2.T) + (b1 @ w2.T + b2)
    w1f = jnp.asarray(w1, jnp.float32)
    w2f = jnp.asarray(w2, jnp.float32)
    w_fused = w1f.T @ w2f.T
    b_fused = jnp.asarray(b1, jnp.float32) @ w2f.T + jnp.asarray(b2, jnp.float32)

    w_dtype = jnp.bfloat16 if use_bf16 else jnp.float32
    return w_fused.astype(w_dtype), b_fused.reshape(1, -1)   # bias stays f32


def _round_up(v, m):
    return ((v + m - 1) // m) * m


# ---------------------------------------------------------------------------
# Forward pass.
# ---------------------------------------------------------------------------
@functools.partial(jax.jit, static_argnames=("tb",))
def linear_model_forward(x, w_p, b_p, *, tb=1024):
    """Forward pass of linearModel using the fused Pallas kernel.

    x   : [B, in_ch]        (f32 or bf16; cast handled in-kernel)
    w_p : [in_ch, out_ch]   fused weight from prepare_params
    b_p : [1, out_ch]       fused bias (f32)
    returns [B, out_ch] float32
    """
    B, in_ch = x.shape
    in_ch_w, out_ch = w_p.shape
    assert in_ch == in_ch_w, "x / fused-weight shape mismatch"

    out_dtype = jnp.float32
    x_bytes = jnp.dtype(x.dtype).itemsize
    w_bytes = jnp.dtype(w_p.dtype).itemsize
    out_bytes = jnp.dtype(out_dtype).itemsize

    # Sublane tile: 8 for f32, 16 for bf16 weights.
    sub = 16 if w_p.dtype == jnp.bfloat16 else 8

    # --- Batch tile selection -------------------------------------------
    # (a) explicit VMEM budget (double-buffered x tile + output tile), kept
    #     well under v7x's 32 MiB default scoped VMEM.
    vmem_budget = 24 * 1024 * 1024
    per_row_bytes = 2 * (in_ch * x_bytes + out_ch * out_bytes)
    tb_budget = max(sub, vmem_budget // per_row_bytes)

    # (b) never bigger than the (sublane-rounded) batch.
    tb_eff = min(tb, tb_budget, _round_up(B, sub))

    # (c) ensure >= 2 grid steps when the batch allows it, so the "parallel"
    #     axis actually gives v7x's two TensorCores work to split.
    if B > 2 * sub:
        tb_eff = min(tb_eff, _round_up((B + 1) // 2, sub))

    tb_eff = max(sub, (tb_eff // sub) * sub)

    # Ragged final block handled by Pallas masking -- no jnp.pad copy.
    grid = (pl.cdiv(B, tb_eff),)

    cost = pl.CostEstimate(
        flops=2 * B * in_ch * out_ch,
        transcendentals=0,
        bytes_accessed=(B * in_ch * x_bytes
                        + B * out_ch * out_bytes
                        + in_ch * out_ch * w_bytes
                        + out_ch * 4),
    )

    return pl.pallas_call(
        _fused_linear_kernel,
        out_shape=jax.ShapeDtypeStruct((B, out_ch), out_dtype),
        grid=grid,
        in_specs=[
            pl.BlockSpec((tb_eff, in_ch), lambda i: (i, 0)),   # x tile
            pl.BlockSpec((in_ch, out_ch), lambda i: (0, 0)),   # fused weight
            pl.BlockSpec((1, out_ch), lambda i: (0, 0)),       # fused bias
        ],
        out_specs=pl.BlockSpec((tb_eff, out_ch), lambda i: (i, 0)),
        compiler_params=pltpu.CompilerParams(
            # Batch axis is embarrassingly parallel -> megacore sharding.
            dimension_semantics=("parallel",),
            vmem_limit_bytes=32 * 1024 * 1024,
        ),
        cost_estimate=cost,
    )(x, w_p, b_p)


if __name__ == "__main__":
    # Deterministic parameter / input construction (synthetic, no checkpoint).
    in_channel = 32
    out_channel = 4
    hidden = 10
    batch = 8

    key = jax.random.PRNGKey(0)
    kx, kw1, kb1, kw2, kb2, kx2, kx3 = jax.random.split(key, 7)

    x = jax.random.normal(kx, (batch, in_channel), dtype=jnp.float32)

    # Mimic torch's U(-1/sqrt(fan_in), 1/sqrt(fan_in)) init deterministically.
    bound1 = 1.0 / jnp.sqrt(in_channel)
    w1 = jax.random.uniform(kw1, (hidden, in_channel), jnp.float32, -bound1, bound1)
    b1 = jax.random.uniform(kb1, (hidden,), jnp.float32, -bound1, bound1)

    bound2 = 1.0 / jnp.sqrt(hidden)
    w2 = jax.random.uniform(kw2, (out_channel, hidden), jnp.float32, -bound2, bound2)
    b2 = jax.random.uniform(kb2, (out_channel,), jnp.float32, -bound2, bound2)

    # Pure-JAX reference of the original two-layer forward.
    def ref_fn(xx):
        return (xx @ w1.T + b1) @ w2.T + b2

    # One-time parameter prep (fusion).  f32 for tight numeric checks.
    w_p, b_p = prepare_params(w1, b1, w2, b2, use_bf16=False)

    # --- test 1: tiny batch (single tile) -------------------------------
    out = jax.block_until_ready(linear_model_forward(x, w_p, b_p))
    assert out.shape == (batch, out_channel)
    assert jnp.allclose(out, ref_fn(x), atol=1e-5, rtol=1e-5)

    # --- test 2: ragged batch, small tile (multi-step grid + masked tail) -
    batch2 = 13
    x2 = jax.random.normal(kx2, (batch2, in_channel), dtype=jnp.float32)
    out2 = jax.block_until_ready(linear_model_forward(x2, w_p, b_p, tb=8))
    assert out2.shape == (batch2, out_channel)
    assert jnp.allclose(out2, ref_fn(x2), atol=1e-5, rtol=1e-5)

    # --- test 3: larger ragged batch, default tile (>=2-step cap path) ----
    batch3 = 300
    x3 = jax.random.normal(kx3, (batch3, in_channel), dtype=jnp.float32)
    out3 = jax.block_until_ready(linear_model_forward(x3, w_p, b_p))
    assert out3.shape == (batch3, out_channel)
    assert jnp.allclose(out3, ref_fn(x3), atol=1e-5, rtol=1e-5)

    # --- test 4: bf16 weights, f32 accumulate (looser tolerance) ----------
    w_pb, b_pb = prepare_params(w1, b1, w2, b2, use_bf16=True)
    out4 = jax.block_until_ready(linear_model_forward(x2, w_pb, b_pb, tb=16))
    assert out4.shape == (batch2, out_channel)
    assert jnp.allclose(out4, ref_fn(x2), atol=1e-1, rtol=1e-1)

    print("KERNEL_OK")
</pallas_src>

<mosaic_0001>
module attributes {stable_mosaic.version = 11 : i64} {
  func.func @_fused_linear_kernel(%arg0: i32, %arg1: memref<8x32xf32, #tpu.memory_space<vmem>>, %arg2: memref<32x4xf32, #tpu.memory_space<vmem>>, %arg3: memref<1x4xf32, #tpu.memory_space<vmem>>, %arg4: memref<8x4xf32, #tpu.memory_space<vmem>>) attributes {dimension_semantics = [#tpu.dimension_semantics<parallel>], iteration_bounds = array<i64: 1>, scalar_prefetch = 0 : i64, scratch_operands = 0 : i64, tpu.core_type = #tpu.core_type<tc>, window_params = [{transform_indices = @transform_0, window_bounds = array<i64: 8, 32>}, {pipeline_mode = #tpu.pipeline_mode<synchronous>, transform_indices = @transform_1, window_bounds = array<i64: 32, 4>}, {pipeline_mode = #tpu.pipeline_mode<synchronous>, transform_indices = @transform_2, window_bounds = array<i64: 1, 4>}, {transform_indices = @transform_3, window_bounds = array<i64: 8, 4>}]} {
    %c0 = arith.constant 0 : index
    %c0_0 = arith.constant 0 : index
    %0 = vector.load %arg1[%c0, %c0_0] : memref<8x32xf32, #tpu.memory_space<vmem>>, vector<8x32xf32>
    %c0_1 = arith.constant 0 : index
    %c0_2 = arith.constant 0 : index
    %1 = vector.load %arg2[%c0_1, %c0_2] : memref<32x4xf32, #tpu.memory_space<vmem>>, vector<32x4xf32>
    %cst = arith.constant dense<0.000000e+00> : vector<8x4xf32>
    %2 = tpu.matmul %0, %1, %cst {dimension_numbers = #tpu.dot_dimension_numbers<[1], [0], [0], [1], [0, 0, 1, 1], [], []>} : vector<8x32xf32>, vector<32x4xf32>, vector<8x4xf32> -> vector<8x4xf32>
    %c0_3 = arith.constant 0 : index
    %c0_4 = arith.constant 0 : index
    %3 = vector.load %arg3[%c0_3, %c0_4] : memref<1x4xf32, #tpu.memory_space<vmem>>, vector<1x4xf32>
    %4 = vector.broadcast %3 : vector<1x4xf32> to vector<8x4xf32>
    %5 = arith.addf %2, %4 : vector<8x4xf32>
    %c0_5 = arith.constant 0 : index
    %c0_6 = arith.constant 0 : index
    %6 = vector.load %arg4[%c0_5, %c0_6] : memref<8x4xf32, #tpu.memory_space<vmem>>, vector<8x4xf32>
    tpu.vector_store %arg4[%c0_5, %c0_6], %5 {strides = array<i32>} : memref<8x4xf32, #tpu.memory_space<vmem>>, vector<8x4xf32>,
    return
  }
  func.func @transform_0(%arg0: i32) -> (i32, i32) {
    %c0_i32 = arith.constant 0 : i32
    %c0_i32_0 = arith.constant 0 : i32
    return %arg0, %c0_i32 : i32, i32
  }
  func.func @transform_1(%arg0: i32) -> (i32, i32) {
    %c0_i32 = arith.constant 0 : i32
    %c0_i32_0 = arith.constant 0 : i32
    %c0_i32_1 = arith.constant 0 : i32
    return %c0_i32, %c0_i32_0 : i32, i32
  }
  func.func @transform_2(%arg0: i32) -> (i32, i32) {
    %c0_i32 = arith.constant 0 : i32
    %c0_i32_0 = arith.constant 0 : i32
    %c0_i32_1 = arith.constant 0 : i32
    return %c0_i32, %c0_i32_0 : i32, i32
  }
  func.func @transform_3(%arg0: i32) -> (i32, i32) {
    %c0_i32 = arith.constant 0 : i32
    %c0_i32_0 = arith.constant 0 : i32
    return %arg0, %c0_i32 : i32, i32
  }
}

</mosaic_0001>

<llo_original>
// kernel: linear_model_forward.1
$region0: #{linear_model_forward.1}
  #allocation0 [shape = 'u32[]', space=smem, size = 0x4, offset = 0x4, fixed_abs, tag = 'smem constant byte address 0x4 - core index']
  #allocation1 [shape = 'u32[144,128]{1,0:T(1,128)}', space=vmem, size = 0x12000, scoped, tag = 'internal scratch']
  %s0 = inlined_call_operand.vmem [shape: f32[8,32], index: 0, kind: input, shape index: {}]
  %s1 = inlined_call_operand.vmem [shape: f32[32,4], index: 1, kind: input, shape index: {}]
  %s2 = inlined_call_operand.vmem [shape: f32[1,4], index: 2, kind: input, shape index: {}]
  %s3 = inlined_call_operand.vmem [shape: f32[8,4], index: 3, kind: output, shape index: {}]
  %s4 = sld [smem:[#allocation0]]
  $region22: #{linear_model_forward.1} parent=0
    _
  %s6 = ssub.s32 1, %s4
  %s7 = scalar_select 0, %s6, %s4
  // Predicated region
  $region2: #{linear_model_forward.1} parent=0 // pred_check
    _
  $region3: #{linear_model_forward.1} parent=0 // pred_check_branch
    %9 = sbr.rel (0) target = $region5
  $region4: #{linear_model_forward.1} parent=0 // pred_region
    _
  $region5: #{linear_model_forward.1} parent=0 // pred_fallthru
    _
  // Predicated region
  $region6: #{linear_model_forward.1} parent=0 // pred_check
    _
  $region7: #{linear_model_forward.1} parent=0 // pred_check_branch
    %11 = sbr.rel (0) target = $region9
  $region8: #{linear_model_forward.1} parent=0 // pred_region
    _
  $region9: #{linear_model_forward.1} parent=0 // pred_fallthru
    _
  // Predicated region
  $region10: #{linear_model_forward.1} parent=0 // pred_check
    _
  $region11: #{linear_model_forward.1} parent=0 // pred_check_branch
    %13 = sbr.rel (0) target = $region13
  $region12: #{linear_model_forward.1} parent=0 // pred_region
    _
  $region13: #{linear_model_forward.1} parent=0 // pred_fallthru
    _
  %v14 = vld [vmem:[%s0] sm:$0xff]
  %v15 = vld [vmem:[%s1] sm:$0xff]
  %v16 = vld [vmem:[%s1 + $0x8] sm:$0xff]
  %v17 = vld [vmem:[%s1 + $0x10] sm:$0xff]
  %v18 = vld [vmem:[%s1 + $0x18] sm:$0xff]
  %v19 = vld [vmem:[%s2] sm:$0x1]
  %v21 = vlaneseq
  %v22 = vshrl.u32 %v21, 7
  %v23 = vsub.s32 0, %v22
  %v24 = vrot.slane %v19, %v23
  %vm26 = vcmask 261120
  %v28 = vsel %vm26, %v14, 0
  %30 = vmatprep.subr.mxu0 0.0
  %31 = vmatpush1.msra.mxu0 %v15
  %32 = vmatprep.subr.mxu0 0.0
  %33 = vmatpush1.msra.mxu0 %v16
  %34 = vmatprep.subr.mxu0 0.0
  %35 = vmatpush1.msra.mxu0 %v17
  %36 = vmatprep.subr.mxu0 0.0
  %37 = vmatpush1.msra.mxu0 %v18
  %38 = vmatprep.subr.mxu0 0.0
  %39 = vmatpush1.msra.mxu0 0.0
  %40 = vmatprep.subr.mxu0 0.0
  %41 = vmatpush1.msra.mxu0 0.0
  %42 = vmatprep.subr.mxu0 0.0
  %43 = vmatpush1.msra.mxu0 0.0
  %44 = vmatprep.subr.mxu0 0.0
  %45 = vmatpush1.msra.mxu0 0.0
  %46 = vmatprep.subr.mxu0 0.0
  %47 = vmatpush1.msra.mxu0 0.0
  %48 = vmatprep.subr.mxu0 0.0
  %49 = vmatpush1.msra.mxu0 0.0
  %50 = vmatprep.subr.mxu0 0.0
  %51 = vmatpush1.msra.mxu0 0.0
  %52 = vmatprep.subr.mxu0 0.0
  %53 = vmatpush1.msra.mxu0 0.0
  %54 = vmatprep.subr.mxu0 0.0
  %55 = vmatpush1.msra.mxu0 0.0
  %56 = vmatprep.subr.mxu0 0.0
  %57 = vmatpush1.msra.mxu0 0.0
  %58 = vmatprep.subr.mxu0 0.0
  %59 = vmatpush1.msra.mxu0 0.0
  %60 = vmatprep.subr.mxu0 0.0
  %61 = vmatpush1.msra.mxu0 0.0
  %62 = vmatprep.subr.mxu0 0.0
  %63 = vmatpush1.msra.mxu0 0.0
  %64 = vmatprep.subr.mxu0 0.0
  %65 = vmatpush1.msra.mxu0 0.0
  %66 = vmatprep.subr.mxu0 0.0
  %67 = vmatpush1.msra.mxu0 0.0
  %68 = vmatprep.subr.mxu0 0.0
  %69 = vmatpush1.msra.mxu0 0.0
  %70 = vmatprep.subr.mxu0 0.0
  %71 = vmatpush1.msra.mxu0 0.0
  %72 = vmatprep.subr.mxu0 0.0
  %73 = vmatpush1.msra.mxu0 0.0
  %74 = vmatprep.subr.mxu0 0.0
  %75 = vmatpush1.msra.mxu0 0.0
  %76 = vmatprep.subr.mxu0 0.0
  %77 = vmatpush1.msra.mxu0 0.0
  %78 = vmatprep.subr.mxu0 0.0
  %79 = vmatpush1.msra.mxu0 0.0
  %80 = vmatprep.subr.mxu0 0.0
  %81 = vmatpush1.msra.mxu0 0.0
  %82 = vmatprep.subr.mxu0 0.0
  %83 = vmatpush1.msra.mxu0 0.0
  %84 = vmatprep.subr.mxu0 0.0
  %85 = vmatpush1.msra.mxu0 0.0
  %86 = vmatprep.subr.mxu0 0.0
  %87 = vmatpush1.msra.mxu0 0.0
  %88 = vmatprep.subr.mxu0 0.0
  %89 = vmatpush1.msra.mxu0 0.0
  %90 = vmatprep.subr.mxu0 0.0
  %91 = vmatpush1.msra.mxu0 0.0
  %92 = vmatprep.subr.mxu0 0.0
  %93 = vmatpush1.msra.mxu0 0.0
  %94 = vmatprep.mubr.f32.mxu0 0.0
  %95 = vmatmul.mubr.f32.gmra.mrb[0].mxu0 %v28
  %v96 = vpop.f32.mrb[0].mxu0
  %v97 = vadd.f32 %v24, %v96
  %v98 = vpop.f32.mrb[0].mxu0
  %99 = vdwg.mxu0
  %vm100 = vcmask 31744
  %101 = vst.msk [vmem:[%s3] sm:$0xff] %vm100, %v97
  // Predicated region
  $region14: #{linear_model_forward.1} parent=0 // pred_check
    _
  $region15: #{linear_model_forward.1} parent=0 // pred_check_branch
    %103 = sbr.rel (0) target = $region17
  $region16: #{linear_model_forward.1} parent=0 // pred_region
    _
  $region17: #{linear_model_forward.1} parent=0 // pred_fallthru
    _
  // Predicated region
  $region18: #{linear_model_forward.1} parent=0 // pred_check
    _
  $region19: #{linear_model_forward.1} parent=0 // pred_check_branch
    %105 = sbr.rel (0) target = $region21
  $region20: #{linear_model_forward.1} parent=0 // pred_region
    _
  $region21: #{linear_model_forward.1} parent=0 // pred_fallthru
    _

</llo_original>
